<compile_context>
chip_gen: v5e
topology: v5e:2x2
jax: 0.10.0
libtpu: 0.0.40
codegen_flags: <defaults>
</compile_context>

<pallas_src>
import math

import jax
import jax.numpy as jnp
from jax.experimental import pallas as pl
from jax.experimental.pallas import tpu as pltpu


# ------------------------------ Pallas kernel ------------------------------

def gmm_head_kernel(x_ref, w_ref, b_ref, o_ref):
    """Fused projection o = x @ W_fused + b_fused for one (row, col) tile.

    x_ref: (TM, Din)  activation row tile (input dtype, e.g. f32).
    w_ref: (Din, TN)  fused [mean | logvar | logits | pad] weight tile (bf16).
    b_ref: (1,  TN)   fused bias tile (f32).
    o_ref: (TM, TN)   lane-dense output tile.
    """
    x = x_ref[...].astype(w_ref.dtype)            # bf16 operands for the MXU
    acc = jnp.dot(x, w_ref[...], preferred_element_type=jnp.float32)
    o_ref[...] = (acc + b_ref[...]).astype(o_ref.dtype)


# ------------------------------ tiling helpers ------------------------------

def _round_up(v, mult):
    return (v + mult - 1) // mult * mult


def _vmem_capacity_bytes():
    try:
        return int(pltpu.get_tpu_info().vmem_capacity_bytes)
    except Exception:
        return 64 * 2 ** 20        # conservative (v7x per-TC VMEM)


def _choose_tiles(din, n_pad, x_bytes, w_bytes, out_bytes, budget):
    """Pick (TM, TN) so double-buffered x/out tiles + weights fit the budget.

    Prefer keeping the whole fused weight resident (TN = n_pad, single
    col tile); otherwise stream weight column tiles (v7x small-VMEM path).
    """
    def usage(tm, tn):
        w_copies = 1 if tn >= n_pad else 2        # constant blocks single-buffer
        weights = w_copies * (din * tn * w_bytes + 8 * tn * 4)
        xbuf = 2 * tm * din * x_bytes             # double-buffered x tile
        obuf = 2 * tm * tn * out_bytes            # double-buffered out tile
        return weights + xbuf + obuf

    tn_cands = [n_pad] + [c for c in (8192, 4096, 2048, 1024, 512, 256, 128)
                          if c < n_pad]
    tm_cands = (1024, 512, 256, 128, 64, 32, 16, 8)
    for tm_floor in (256, 8):                     # prefer large row tiles
        for tn in tn_cands:
            for tm in tm_cands:
                if tm < tm_floor:
                    break
                if usage(tm, tn) <= budget:
                    return tm, tn
    return 8, 128


# ------------------------------ JAX glue ------------------------------

def gmm_head(x, params, *, compute_dtype=jnp.bfloat16, interpret=False):
    """x: (..., in_features) -> (logits, mean, logvar) matching GMMHead.forward."""
    *lead, din = x.shape
    m = int(math.prod(lead)) if lead else 1
    x2 = x.reshape(m, din)

    k = params["w_logits"].shape[1]            # num_components
    kd = params["w_mean"].shape[1]             # num_components * out_features
    dout = kd // k

    # Fused weight: columns ordered [mean | logvar | logits | zero-pad], padded
    # to a multiple of 128 so every kernel store is an unmasked lane-dense vst.
    n_total = 2 * kd + k
    n_pad = _round_up(n_total, 128)
    w_fused = jnp.concatenate(
        [params["w_mean"], params["w_logvar"], params["w_logits"]], axis=1)
    b_fused = jnp.concatenate(
        [params["b_mean"], params["b_logvar"], params["b_logits"]], axis=1)
    if n_pad != n_total:
        w_fused = jnp.pad(w_fused, ((0, 0), (0, n_pad - n_total)))
        b_fused = jnp.pad(b_fused, ((0, 0), (0, n_pad - n_total)))
    w_fused = w_fused.astype(compute_dtype)    # bf16 weights: MXU-native, half VMEM
    b_fused = b_fused.astype(jnp.float32)      # bias add stays in f32

    out_dtype = x.dtype
    x_bytes = jnp.dtype(x.dtype).itemsize
    w_bytes = jnp.dtype(compute_dtype).itemsize
    out_bytes = jnp.dtype(out_dtype).itemsize

    capacity = _vmem_capacity_bytes()
    budget = int(capacity * 0.70)              # leave headroom for internal scratch
    tm, tn = _choose_tiles(din, n_pad, x_bytes, w_bytes, out_bytes, budget)

    # Don't allocate a row tile much bigger than the problem; keep >= 2 row
    # tiles when possible so ("parallel", ...) can use both v7x TensorCores.
    tm = min(tm, _round_up(m, 8))
    if m > 8 and pl.cdiv(m, tm) < 2:
        tm = _round_up(pl.cdiv(m, 2), 8)
    grid = (pl.cdiv(m, tm), pl.cdiv(n_pad, tn))
    weight_constant = grid[1] == 1             # weight/bias blocks never change

    vmem_need = ((1 if weight_constant else 2) * (din * tn * w_bytes + 8 * tn * 4)
                 + 2 * tm * din * x_bytes + 2 * tm * tn * out_bytes)
    vmem_limit = int(min(capacity - 8 * 2 ** 20,
                         max(vmem_need * 5 // 4 + 2 ** 20, 32 * 2 ** 20)))
    cost = pl.CostEstimate(
        flops=2 * m * din * n_pad,
        transcendentals=0,
        bytes_accessed=(m * din * x_bytes + din * n_pad * w_bytes
                        + m * n_pad * out_bytes))

    def build(single_buffer_weights):
        wmode = ({"pipeline_mode": pl.Buffered(1)}
                 if single_buffer_weights else {})
        in_specs = [
            pl.BlockSpec((tm, din), lambda i, j: (i, 0)),
            pl.BlockSpec((din, tn), lambda i, j: (0, j), **wmode),
            pl.BlockSpec((1, tn), lambda i, j: (0, j), **wmode),
        ]
        out_spec = pl.BlockSpec((tm, tn), lambda i, j: (i, j))
        return pl.pallas_call(
            gmm_head_kernel,
            out_shape=jax.ShapeDtypeStruct((m, n_pad), out_dtype),
            grid=grid,
            in_specs=in_specs,
            out_specs=out_spec,
            compiler_params=pltpu.CompilerParams(
                dimension_semantics=("parallel", "parallel"),
                vmem_limit_bytes=vmem_limit),
            cost_estimate=cost,
            interpret=interpret,
        )(x2, w_fused, b_fused)

    if weight_constant:
        try:
            fused = build(True)
        except Exception:          # pl.Buffered(1) unsupported on this jax build
            fused = build(False)
    else:
        fused = build(False)

    # Slice the fused slab back apart (wrapper-side; kernel stores stay dense).
    mean = fused[:, :kd].reshape(*lead, k, dout)
    logvar = fused[:, kd:2 * kd].reshape(*lead, k, dout)
    logits = fused[:, 2 * kd:2 * kd + k].reshape(*lead, k)
    return logits, mean, logvar


def init_params(key, in_features, out_features, num_components):
    """PyTorch nn.Linear default init; logvar_proj is zero-initialized (zero_init)."""
    ks = jax.random.split(key, 4)
    bound = 1.0 / math.sqrt(in_features)

    def lin(k, fout):
        kw, kb = jax.random.split(k)
        w = jax.random.uniform(kw, (in_features, fout), jnp.float32, -bound, bound)
        b = jax.random.uniform(kb, (1, fout), jnp.float32, -bound, bound)
        return w, b

    w_logits, b_logits = lin(ks[0], num_components)
    w_mean, b_mean = lin(ks[1], num_components * out_features)
    # zero_init(nn.Linear(...)) -> all parameters zero
    w_logvar = jnp.zeros((in_features, num_components * out_features), jnp.float32)
    b_logvar = jnp.zeros((1, num_components * out_features), jnp.float32)
    return dict(w_logits=w_logits, b_logits=b_logits,
                w_mean=w_mean, b_mean=b_mean,
                w_logvar=w_logvar, b_logvar=b_logvar)


# ------------------------------ pure-JAX reference ------------------------------

def reference_gmm_head(x, params):
    k = params["w_logits"].shape[1]
    dout = params["w_mean"].shape[1] // k
    logits = x @ params["w_logits"] + params["b_logits"][0]
    mean = (x @ params["w_mean"] + params["b_mean"][0]).reshape(*x.shape[:-1], k, dout)
    logvar = (x @ params["w_logvar"] + params["b_logvar"][0]).reshape(*x.shape[:-1], k, dout)
    return logits, mean, logvar


if __name__ == "__main__":
    N, S, DIN, DOUT, K = 2, 8, 32, 16, 4       # 16 rows, fused width 4+64+64=132 -> 256
    key = jax.random.PRNGKey(0)
    kx, kp = jax.random.split(key)

    x = jax.random.normal(kx, (N, S, DIN), jnp.float32)
    params = init_params(kp, DIN, DOUT, K)

    ref_logits, ref_mean, ref_logvar = reference_gmm_head(x, params)

    # Default (bf16 MXU operands) path — relaxed tolerance vs the f32 reference.
    logits, mean, logvar = jax.block_until_ready(gmm_head(x, params))
    assert logits.shape == (N, S, K)
    assert mean.shape == (N, S, K, DOUT)
    assert logvar.shape == (N, S, K, DOUT)
    assert jnp.allclose(logits, ref_logits, rtol=5e-2, atol=5e-2), "logits mismatch"
    assert jnp.allclose(mean, ref_mean, rtol=5e-2, atol=5e-2), "mean mismatch"
    assert jnp.allclose(logvar, ref_logvar, rtol=5e-2, atol=5e-2), "logvar mismatch"

    # Exact f32 path for tight numerical verification.
    logits32, mean32, logvar32 = jax.block_until_ready(
        gmm_head(x, params, compute_dtype=jnp.float32))
    assert jnp.allclose(logits32, ref_logits, rtol=2e-3, atol=2e-3), "logits f32 mismatch"
    assert jnp.allclose(mean32, ref_mean, rtol=2e-3, atol=2e-3), "mean f32 mismatch"
    assert jnp.allclose(logvar32, ref_logvar, rtol=2e-3, atol=2e-3), "logvar f32 mismatch"

    print("KERNEL_OK")
</pallas_src>

<mosaic_0001>
module attributes {stable_mosaic.version = 11 : i64} {
  func.func @gmm_head_kernel(%arg0: i32, %arg1: i32, %arg2: memref<8x32xf32, #tpu.memory_space<vmem>>, %arg3: memref<32x256xbf16, #tpu.memory_space<vmem>>, %arg4: memref<1x256xf32, #tpu.memory_space<vmem>>, %arg5: memref<8x256xf32, #tpu.memory_space<vmem>>) attributes {dimension_semantics = [#tpu.dimension_semantics<parallel>, #tpu.dimension_semantics<parallel>], iteration_bounds = array<i64: 2, 1>, scalar_prefetch = 0 : i64, scratch_operands = 0 : i64, tpu.core_type = #tpu.core_type<tc>, window_params = [{transform_indices = @transform_0, window_bounds = array<i64: 8, 32>}, {pipeline_mode = #tpu.pipeline_mode<synchronous>, transform_indices = @transform_1, window_bounds = array<i64: 32, 256>}, {pipeline_mode = #tpu.pipeline_mode<synchronous>, transform_indices = @transform_2, window_bounds = array<i64: 1, 256>}, {transform_indices = @transform_3, window_bounds = array<i64: 8, 256>}]} {
    %c0 = arith.constant 0 : index
    %c0_0 = arith.constant 0 : index
    %0 = vector.load %arg2[%c0, %c0_0] : memref<8x32xf32, #tpu.memory_space<vmem>>, vector<8x32xf32>
    %1 = arith.truncf %0 : vector<8x32xf32> to vector<8x32xbf16>
    %c0_1 = arith.constant 0 : index
    %c0_2 = arith.constant 0 : index
    %2 = vector.load %arg3[%c0_1, %c0_2] : memref<32x256xbf16, #tpu.memory_space<vmem>>, vector<32x256xbf16>
    %cst = arith.constant dense<0.000000e+00> : vector<8x256xf32>
    %3 = tpu.matmul %1, %2, %cst {dimension_numbers = #tpu.dot_dimension_numbers<[1], [0], [0], [1], [0, 0, 1, 1], [], []>} : vector<8x32xbf16>, vector<32x256xbf16>, vector<8x256xf32> -> vector<8x256xf32>
    %c0_3 = arith.constant 0 : index
    %c0_4 = arith.constant 0 : index
    %4 = vector.load %arg4[%c0_3, %c0_4] : memref<1x256xf32, #tpu.memory_space<vmem>>, vector<1x256xf32>
    %5 = vector.broadcast %4 : vector<1x256xf32> to vector<8x256xf32>
    %6 = arith.addf %3, %5 : vector<8x256xf32>
    %c0_5 = arith.constant 0 : index
    %c0_6 = arith.constant 0 : index
    %7 = vector.load %arg5[%c0_5, %c0_6] : memref<8x256xf32, #tpu.memory_space<vmem>>, vector<8x256xf32>
    tpu.vector_store %arg5[%c0_5, %c0_6], %6 {strides = array<i32>} : memref<8x256xf32, #tpu.memory_space<vmem>>, vector<8x256xf32>,
    return
  }
  func.func @transform_0(%arg0: i32, %arg1: i32) -> (i32, i32) {
    %c0_i32 = arith.constant 0 : i32
    %c0_i32_0 = arith.constant 0 : i32
    return %arg0, %c0_i32 : i32, i32
  }
  func.func @transform_1(%arg0: i32, %arg1: i32) -> (i32, i32) {
    %c0_i32 = arith.constant 0 : i32
    %c0_i32_0 = arith.constant 0 : i32
    return %c0_i32, %arg1 : i32, i32
  }
  func.func @transform_2(%arg0: i32, %arg1: i32) -> (i32, i32) {
    %c0_i32 = arith.constant 0 : i32
    %c0_i32_0 = arith.constant 0 : i32
    return %c0_i32, %arg1 : i32, i32
  }
  func.func @transform_3(%arg0: i32, %arg1: i32) -> (i32, i32) {
    %c0_i32 = arith.constant 0 : i32
    return %arg0, %arg1 : i32, i32
  }
}

module attributes {stable_mosaic.version = 11 : i64} {
  func.func @gmm_head_kernel(%arg0: i32, %arg1: i32, %arg2: memref<8x32xf32, #tpu.memory_space<vmem>>, %arg3: memref<32x256xbf16, #tpu.memory_space<vmem>>, %arg4: memref<1x256xf32, #tpu.memory_space<vmem>>, %arg5: memref<8x256xf32, #tpu.memory_space<vmem>>) attributes {dimension_semantics = [#tpu.dimension_semantics<parallel>, #tpu.dimension_semantics<parallel>], iteration_bounds = array<i64: 2, 1>, scalar_prefetch = 0 : i64, scratch_operands = 0 : i64, tpu.core_type = #tpu.core_type<tc>, window_params = [{transform_indices = @transform_0, window_bounds = array<i64: 8, 32>}, {transform_indices = @transform_1, window_bounds = array<i64: 32, 256>}, {transform_indices = @transform_2, window_bounds = array<i64: 1, 256>}, {transform_indices = @transform_3, window_bounds = array<i64: 8, 256>}]} {
    %c0 = arith.constant 0 : index
    %c0_0 = arith.constant 0 : index
    %0 = vector.load %arg2[%c0, %c0_0] : memref<8x32xf32, #tpu.memory_space<vmem>>, vector<8x32xf32>
    %1 = arith.truncf %0 : vector<8x32xf32> to vector<8x32xbf16>
    %c0_1 = arith.constant 0 : index
    %c0_2 = arith.constant 0 : index
    %2 = vector.load %arg3[%c0_1, %c0_2] : memref<32x256xbf16, #tpu.memory_space<vmem>>, vector<32x256xbf16>
    %cst = arith.constant dense<0.000000e+00> : vector<8x256xf32>
    %3 = tpu.matmul %1, %2, %cst {dimension_numbers = #tpu.dot_dimension_numbers<[1], [0], [0], [1], [0, 0, 1, 1], [], []>} : vector<8x32xbf16>, vector<32x256xbf16>, vector<8x256xf32> -> vector<8x256xf32>
    %c0_3 = arith.constant 0 : index
    %c0_4 = arith.constant 0 : index
    %4 = vector.load %arg4[%c0_3, %c0_4] : memref<1x256xf32, #tpu.memory_space<vmem>>, vector<1x256xf32>
    %5 = vector.broadcast %4 : vector<1x256xf32> to vector<8x256xf32>
    %6 = arith.addf %3, %5 : vector<8x256xf32>
    %c0_5 = arith.constant 0 : index
    %c0_6 = arith.constant 0 : index
    %7 = vector.load %arg5[%c0_5, %c0_6] : memref<8x256xf32, #tpu.memory_space<vmem>>, vector<8x256xf32>
    tpu.vector_store %arg5[%c0_5, %c0_6], %6 {strides = array<i32>} : memref<8x256xf32, #tpu.memory_space<vmem>>, vector<8x256xf32>,
    return
  }
  func.func @transform_0(%arg0: i32, %arg1: i32) -> (i32, i32) {
    %c0_i32 = arith.constant 0 : i32
    %c0_i32_0 = arith.constant 0 : i32
    return %arg0, %c0_i32 : i32, i32
  }
  func.func @transform_1(%arg0: i32, %arg1: i32) -> (i32, i32) {
    %c0_i32 = arith.constant 0 : i32
    %c0_i32_0 = arith.constant 0 : i32
    return %c0_i32, %arg1 : i32, i32
  }
  func.func @transform_2(%arg0: i32, %arg1: i32) -> (i32, i32) {
    %c0_i32 = arith.constant 0 : i32
    %c0_i32_0 = arith.constant 0 : i32
    return %c0_i32, %arg1 : i32, i32
  }
  func.func @transform_3(%arg0: i32, %arg1: i32) -> (i32, i32) {
    %c0_i32 = arith.constant 0 : i32
    return %arg0, %arg1 : i32, i32
  }
}

</mosaic_0001>

<llo_original>
// kernel: tpu_custom_call.1
$region0: #{tpu_custom_call.1}
  #allocation0 [shape = 'u32[]', space=smem, size = 0x4, offset = 0x4, fixed_abs, tag = 'smem constant byte address 0x4 - core index']
  #allocation1 [shape = 'u32[72,128]{1,0:T(1,128)}', space=vmem, size = 0x9000, scoped, tag = 'internal scratch']
  %s0 = inlined_call_operand.hbm [shape: f32[16,32], index: 0, kind: input, shape index: {}]
  %s1 = inlined_call_operand.hbm [shape: bf16[32,256], index: 1, kind: input, shape index: {}]
  %s2 = inlined_call_operand.hbm [shape: f32[1,256], index: 2, kind: input, shape index: {}]
  %s3 = inlined_call_operand.hbm [shape: f32[16,256], index: 3, kind: output, shape index: {}]
  %s4 = sld [smem:[#allocation0]]
  $region57: #{tpu_custom_call.1} parent=0
    _
  %s6 = ssub.s32 1, %s4
  %s7 = scalar_select 0, %s6, %s4
  $region1: #{tpu_custom_call.1} parent=0
    #allocation2 [shape = 'u8[8192]{0}', space=vmem, size = 0x2000, scoped, tag = 'input window, operand 0']
    #allocation3 [shape = 's32[2]{0}', space=sflag, size = 0x8, scoped, tag = 'scoped memory for tpu_custom_call.1']
    #allocation4 [shape = 's32[2]{0}', space=sflag, size = 0x8, scoped, tag = 'scoped memory for tpu_custom_call.1']
    #allocation5 [shape = 'u8[16384]{0}', space=vmem, size = 0x4000, scoped, tag = 'input window, operand 1, single buffered']
    #allocation6 [shape = 's32[1]{0}', space=sflag, size = 0x4, scoped, tag = 'scoped memory for tpu_custom_call.1']
    #allocation7 [shape = 'u8[1024]{0}', space=vmem, size = 0x400, scoped, tag = 'input window, operand 2, single buffered']
    #allocation8 [shape = 'u8[16384]{0}', space=vmem, size = 0x4000, scoped, tag = 'output window, operand 0']
    %8 = vsyncpa [#allocation3], 0
    %s9 = scalar_lea.sflag [#allocation3], 1
    %10 = vsyncpa %s9, 0
    %11 = vsyncpa [#allocation6], 0
    %12 = vsyncpa [#allocation4], 0
    %s13 = scalar_lea.sflag [#allocation4], 1
    %14 = vsyncpa %s13, 0
    loop: start=0, step=1, limit=4
    $region2: #{tpu_custom_call.1} parent=1 // loop_pre_header
      _
    $region3: #{tpu_custom_call.1} parent=1 // loop_header
      %s16 = sphi 0, %s20
      %p17 = scmp.ge.s32.totalorder %s16, 4
      %s23 = sphi 0, %s35
      %s24 = sphi 0, %s31
      %s25 = sphi 0, %s23
      %s26 = sphi 0, %s24
      %s27 = sphi 0, %s25
      %s28 = sphi 0, %s26
      %s38 = sphi 0, %s40
      %s41 = sphi 0, %s38
      %s42 = sphi 0, %s41
      %s58 = sphi 0, %s42
      %s64 = sphi 0, %s66
      %s67 = sphi 0, %s64
      %s68 = sphi 0, %s67
      %s84 = sphi 0, %s68
      %s90 = sphi 0, %s92
      %s93 = sphi 0, %s90
      %s94 = sphi 0, %s93
      %s110 = sphi 0, %s94
      %s118 = sphi 0, %s120
      %s121 = sphi 0, %s118
      %s122 = sphi 0, %s121
      %s138 = sphi 0, %s122
    $region4: #{tpu_custom_call.1} parent=1 // loop_header_branch
      %19 = sbr.rel (%p17) target = $region8
    $region5: #{tpu_custom_call.1} parent=1 // loop_body
      %s21 = ssub.s32 %s16, 1
      %s22 = ssub.s32 %s16, 2
      %s29 = sadd.s32 1, %s24
      %p30 = scmp.ge.s32.totalorder %s29, 1
      %s31 = scalar_select %p30, 0, %s29
      %s32 = sadd.s32 1, %s23
      %s33 = scalar_select %p30, %s32, %s23
      %p34 = scmp.ge.s32.totalorder %s33, 2
      %s35 = scalar_select %p34, 0, %s33
      %s36 = ssub.s32 %s23, %s35
      %p37 = scmp.eq.s32.totalorder %s36, 0
      %s39 = sadd.s32 %s38, 1
      %s40 = scalar_select %p37, %s38, %s39
      %p43 = pneg %p37
      %p44 = scmp.eq.s32.totalorder %s16, 1
      %p45 = por %p43, %p44
      %p46 = scmp.ne.s32.totalorder %s38, %s41
      %p47 = scmp.eq.s32.totalorder %s16, 0
      %p48 = por %p46, %p47
      %p49 = scmp.ne.s32.totalorder %s38, %s41
      %p50 = scmp.eq.s32.totalorder %s21, 1
      %p51 = por %p49, %p50
      %p52 = scmp.ne.s32.totalorder %s41, %s42
      %p53 = scmp.eq.s32.totalorder %s21, 0
      %p54 = por %p52, %p53
      %p55 = scmp.ne.s32.totalorder %s41, %s42
      %p56 = scmp.eq.s32.totalorder %s22, 1
      %p57 = por %p55, %p56
      %p59 = scmp.ne.s32.totalorder %s42, %s58
      %p60 = scmp.eq.s32.totalorder %s22, 0
      %p61 = por %p59, %p60
      %s62 = ssub.s32 %s24, %s31
      %p63 = scmp.eq.s32.totalorder %s62, 0
      %s65 = sadd.s32 %s64, 1
      %s66 = scalar_select %p63, %s64, %s65
      %p69 = pneg %p63
      %p70 = scmp.eq.s32.totalorder %s16, 1
      %p71 = por %p69, %p70
      %p72 = scmp.ne.s32.totalorder %s64, %s67
      %p73 = scmp.eq.s32.totalorder %s16, 0
      %p74 = por %p72, %p73
      %p75 = scmp.ne.s32.totalorder %s64, %s67
      %p76 = scmp.eq.s32.totalorder %s21, 1
      %p77 = por %p75, %p76
      %p78 = scmp.ne.s32.totalorder %s67, %s68
      %p79 = scmp.eq.s32.totalorder %s21, 0
      %p80 = por %p78, %p79
      %p81 = scmp.ne.s32.totalorder %s67, %s68
      %p82 = scmp.eq.s32.totalorder %s22, 1
      %p83 = por %p81, %p82
      %p85 = scmp.ne.s32.totalorder %s68, %s84
      %p86 = scmp.eq.s32.totalorder %s22, 0
      %p87 = por %p85, %p86
      %s88 = ssub.s32 %s24, %s31
      %p89 = scmp.eq.s32.totalorder %s88, 0
      %s91 = sadd.s32 %s90, 1
      %s92 = scalar_select %p89, %s90, %s91
      %p95 = pneg %p89
      %p96 = scmp.eq.s32.totalorder %s16, 1
      %p97 = por %p95, %p96
      %p98 = scmp.ne.s32.totalorder %s90, %s93
      %p99 = scmp.eq.s32.totalorder %s16, 0
      %p100 = por %p98, %p99
      %p101 = scmp.ne.s32.totalorder %s90, %s93
      %p102 = scmp.eq.s32.totalorder %s21, 1
      %p103 = por %p101, %p102
      %p104 = scmp.ne.s32.totalorder %s93, %s94
      %p105 = scmp.eq.s32.totalorder %s21, 0
      %p106 = por %p104, %p105
      %p107 = scmp.ne.s32.totalorder %s93, %s94
      %p108 = scmp.eq.s32.totalorder %s22, 1
      %p109 = por %p107, %p108
      %p111 = scmp.ne.s32.totalorder %s94, %s110
      %p112 = scmp.eq.s32.totalorder %s22, 0
      %p113 = por %p111, %p112
      %s114 = ssub.s32 %s23, %s35
      %s115 = ssub.s32 %s24, %s31
      %s116 = sor.u32 %s114, %s115
      %p117 = scmp.eq.s32.totalorder %s116, 0
      %s119 = sadd.s32 %s118, 1
      %s120 = scalar_select %p117, %s118, %s119
      %p123 = pneg %p117
      %p124 = scmp.eq.s32.totalorder %s16, 1
      %p125 = por %p123, %p124
      %p126 = scmp.ne.s32.totalorder %s118, %s121
      %p127 = scmp.eq.s32.totalorder %s16, 0
      %p128 = por %p126, %p127
      %p129 = scmp.ne.s32.totalorder %s118, %s121
      %p130 = scmp.eq.s32.totalorder %s21, 1
      %p131 = por %p129, %p130
      %p132 = scmp.ne.s32.totalorder %s121, %s122
      %p133 = scmp.eq.s32.totalorder %s21, 0
      %p134 = por %p132, %p133
      %p135 = scmp.ne.s32.totalorder %s121, %s122
      %p136 = scmp.eq.s32.totalorder %s22, 1
      %p137 = por %p135, %p136
      %p139 = scmp.ne.s32.totalorder %s122, %s138
      %p140 = scmp.eq.s32.totalorder %s22, 0
      %p141 = por %p139, %p140
      %p142 = scmp.le.s32.totalorder 1, %s16
      %p143 = scmp.lt.s32.totalorder %s16, 3
      %p144 = pnand %p142, %p143
      %p145 = pneg %p144
      // Predicated region
      $region9: #{tpu_custom_call.1} parent=5 // pred_check
        _
      $region10: #{tpu_custom_call.1} parent=5 // pred_check_branch
        %147 = sbr.rel (%p144) target = $region12
      $region11: #{tpu_custom_call.1} parent=5 // pred_region
        %s148 = ssub.s32 %s16, 1
        // Predicated region
        $region13: #{tpu_custom_call.1} parent=11 // pred_check
          %p149 = pneg %p80
        $region14: #{tpu_custom_call.1} parent=11 // pred_check_branch
          %151 = sbr.rel (%p149) target = $region16
        $region15: #{tpu_custom_call.1} parent=11 // pred_region
          %s152 = smul.u32 2, %s26
          %154 = vsyncadd [#allocation6], 0
          %s155 = smul.addr %s152, 4
          %s156 = scalar_lea.hbm %s1, %s155
          %s157 = sshll.u32 %s156, 4
          %s158 = int_to_ptr.hbm [resolvable:$true] %s157
          %s159 = sshll.u32 [#allocation5], 4
          %s160 = int_to_ptr.vmem [resolvable:$true] %s159
          %165 = dma.hbm_to_vmem [thread:$0]  %s158, 512, %s160, [#allocation6], 128, 128, 8
        $region16: #{tpu_custom_call.1} parent=11 // pred_fallthru
          _
        // Predicated region
        $region17: #{tpu_custom_call.1} parent=11 // pred_check
          %p166 = pneg %p106
        $region18: #{tpu_custom_call.1} parent=11 // pred_check_branch
          %168 = sbr.rel (%p166) target = $region20
        $region19: #{tpu_custom_call.1} parent=11 // pred_region
          %s169 = smul.u32 2, %s26
          %171 = vsyncadd [#allocation6], 0
          %s172 = scalar_lea.hbm %s2, %s169
          %s174 = sshll.u32 %s172, 4
          %s175 = int_to_ptr.hbm [resolvable:$true] %s174
          %s176 = sshll.u32 [#allocation7], 4
          %s177 = int_to_ptr.vmem [resolvable:$true] %s176
          %179 = dma.hbm_to_vmem [thread:$0]  %s175, 32, %s177, [#allocation6]
        $region20: #{tpu_custom_call.1} parent=11 // pred_fallthru
          _
      $region12: #{tpu_custom_call.1} parent=5 // pred_fallthru
        _
      %p180 = scmp.lt.s32.totalorder %s16, 2
      // Predicated region
      $region21: #{tpu_custom_call.1} parent=5 // pred_check
        %p181 = pneg %p180
      $region22: #{tpu_custom_call.1} parent=5 // pred_check_branch
        %183 = sbr.rel (%p181) target = $region24
      $region23: #{tpu_custom_call.1} parent=5 // pred_region
        // Predicated region
        $region25: #{tpu_custom_call.1} parent=23 // pred_check
          %p184 = pneg %p48
        $region26: #{tpu_custom_call.1} parent=23 // pred_check_branch
          %186 = sbr.rel (%p184) target = $region28
        $region27: #{tpu_custom_call.1} parent=23 // pred_region
          %s187 = sand.u32 %s38, 1
          %s188 = scalar_lea.sflag [#allocation3], %s187
          %s189 = sand.u32 %s38, 1
          %s190 = smul.addr %s189, 8
          %s191 = scalar_lea.vmem [#allocation2], %s190
          %193 = vsyncadd %s188, 0
          %s194 = smul.addr %s23, 8
          %s195 = scalar_lea.hbm %s0, %s194
          %s197 = sshll.u32 %s195, 4
          %s198 = int_to_ptr.hbm [resolvable:$true] %s197
          %s199 = sshll.u32 %s191, 4
          %s200 = int_to_ptr.vmem [resolvable:$true] %s199
          %202 = dma.hbm_to_vmem [thread:$0]  %s198, 128, %s200, %s188
        $region28: #{tpu_custom_call.1} parent=23 // pred_fallthru
          _
      $region24: #{tpu_custom_call.1} parent=5 // pred_fallthru
        _
      %p203 = scmp.le.s32.totalorder 1, %s16
      %p204 = scmp.lt.s32.totalorder %s16, 3
      %p205 = pnand %p203, %p204
      %p206 = pneg %p205
      // Predicated region
      $region29: #{tpu_custom_call.1} parent=5 // pred_check
        _
      $region30: #{tpu_custom_call.1} parent=5 // pred_check_branch
        %208 = sbr.rel (%p205) target = $region32
      $region31: #{tpu_custom_call.1} parent=5 // pred_region
        %s209 = ssub.s32 %s16, 1
        %s210 = sand.u32 %s41, 1
        %s211 = scalar_lea.sflag [#allocation3], %s210
        %s212 = sand.u32 %s41, 1
        %s213 = smul.addr %s212, 8
        %s214 = scalar_lea.vmem [#allocation2], %s213
        // Predicated region
        $region33: #{tpu_custom_call.1} parent=31 // pred_check
          %p215 = pneg %p54
        $region34: #{tpu_custom_call.1} parent=31 // pred_check_branch
          %217 = sbr.rel (%p215) target = $region36
        $region35: #{tpu_custom_call.1} parent=31 // pred_region
          %219 = dma.done %s211, 128
        $region36: #{tpu_custom_call.1} parent=31 // pred_fallthru
          _
        // Predicated region
        $region37: #{tpu_custom_call.1} parent=31 // pred_check
          %p220 = pneg %p80
        $region38: #{tpu_custom_call.1} parent=31 // pred_check_branch
          %222 = sbr.rel (%p220) target = $region40
        $region39: #{tpu_custom_call.1} parent=31 // pred_region
          %224 = dma.done [#allocation6], 512
        $region40: #{tpu_custom_call.1} parent=31 // pred_fallthru
          _
        // Predicated region
        $region41: #{tpu_custom_call.1} parent=31 // pred_check
          %p225 = pneg %p106
        $region42: #{tpu_custom_call.1} parent=31 // pred_check_branch
          %227 = sbr.rel (%p225) target = $region44
        $region43: #{tpu_custom_call.1} parent=31 // pred_region
          %229 = dma.done [#allocation6], 32
        $region44: #{tpu_custom_call.1} parent=31 // pred_fallthru
          _
        %s230 = sand.u32 %s41, 1
        %s231 = scalar_lea.sflag [#allocation3], %s230
        %s232 = sand.u32 %s41, 1
        %s233 = smul.addr %s232, 8
        %s234 = scalar_lea.vmem [#allocation2], %s233
        %p235 = pneg %p54
        %p236 = pneg %p51
        %p237 = pneg %p80
        %p238 = pneg %p77
        %p239 = pneg %p106
        %p240 = pneg %p103
        %p241 = pneg %p134
        %p242 = pneg %p131
        %s243 = sand.u32 %s121, 1
        %s244 = scalar_lea.sflag [#allocation4], %s243
        %s245 = sand.u32 %s121, 1
        %s246 = smul.addr %s245, 16
        %s247 = scalar_lea.vmem [#allocation8], %s246
        %s248 = smul.u32 2, %s26
        %s249 = smul.u32 2, %s26
        %s250 = smul.u32 2, %s26
        %v252 = vld [vmem:[%s214] sm:$0xff]
        %v253 = vpack.c.bf16 %v252, %v252
        %v254 = vld [vmem:[#allocation5] sm:$0xff]
        %v255 = vld [vmem:[#allocation5 + $0x8] sm:$0xff]
        %v256 = vld [vmem:[#allocation5 + $0x10] sm:$0xff]
        %v257 = vld [vmem:[#allocation5 + $0x18] sm:$0xff]
        %v258 = vld [vmem:[#allocation7] sm:$0x3]
        %v260 = vperm.slane %v258, 0
        %v261 = vperm.slane %v258, 1
        %v268 = vunpack.c.l.b16 %v254
        %v269 = vunpack.c.h.b16 %v254
        %v270 = vunpack.c.l.b16 %v255
        %v271 = vunpack.c.h.b16 %v255
        %v272 = vunpack.c.l.b16 %v256
        %v273 = vunpack.c.h.b16 %v256
        %v274 = vunpack.c.l.b16 %v257
        %v275 = vunpack.c.h.b16 %v257
        %v276 = vpack.c.b16 %v270, %v268
        %v277 = vpack.c.b16 %v271, %v269
        %v278 = vpack.c.b16 %v274, %v272
        %v279 = vpack.c.b16 %v275, %v273
        %vm284 = vcmask 261120
        %v286 = vsel %vm284, %v253, 0
        %288 = vmatpush.bf16.msra.mxu0 0
        %289 = vmatpush.bf16.msra.mxu0 0
        %290 = vmatpush.bf16.msra.mxu0 0
        %291 = vmatpush.bf16.msra.mxu0 0
        %292 = vmatpush.bf16.msra.mxu0 0
        %293 = vmatpush.bf16.msra.mxu0 0
        %294 = vmatpush.bf16.msra.mxu0 %v278
        %295 = vmatpush.bf16.msra.mxu0 %v276
        %296 = vmatmul.bf16.gmra.mxu0 %v286
        %v297 = vpop.f32.mrf.mxu0
        %v298 = vadd.f32 %v260, %v297
        %v299 = vpop.f32.mrf.mxu0
        %300 = vdwg.mxu0
        %301 = vmatpush.bf16.msra.mxu0 0
        %302 = vmatpush.bf16.msra.mxu0 0
        %303 = vmatpush.bf16.msra.mxu0 0
        %304 = vmatpush.bf16.msra.mxu0 0
        %305 = vmatpush.bf16.msra.mxu0 0
        %306 = vmatpush.bf16.msra.mxu0 0
        %307 = vmatpush.bf16.msra.mxu0 %v279
        %308 = vmatpush.bf16.msra.mxu0 %v277
        %309 = vmatmul.bf16.gmra.mxu0 %v286
        %v310 = vpop.f32.mrf.mxu0
        %v311 = vadd.f32 %v261, %v310
        %v312 = vpop.f32.mrf.mxu0
        %313 = vdwg.mxu0
        %314 = vst [vmem:[%s247] sm:$0xff] %v298
        %315 = vst [vmem:[%s247 + $0x8] sm:$0xff] %v311
        %s316 = sand.u32 %s121, 1
        %s317 = scalar_lea.sflag [#allocation4], %s316
        %s318 = sand.u32 %s121, 1
        %s319 = smul.addr %s318, 16
        %s320 = scalar_lea.vmem [#allocation8], %s319
        // Predicated region
        $region45: #{tpu_custom_call.1} parent=31 // pred_check
          %p321 = pneg %p131
        $region46: #{tpu_custom_call.1} parent=31 // pred_check_branch
          %323 = sbr.rel (%p321) target = $region48
        $region47: #{tpu_custom_call.1} parent=31 // pred_region
          %s324 = smul.u32 2, %s26
          %326 = vsyncadd %s317, 0
          %s327 = smul.addr %s25, 2
          %s328 = sadd.s32 %s324, %s327
          %s329 = smul.addr %s328, 8
          %s330 = scalar_lea.hbm %s3, %s329
          %s332 = sshll.u32 %s320, 4
          %s333 = int_to_ptr.vmem [resolvable:$true] %s332
          %s334 = sshll.u32 %s330, 4
          %s335 = int_to_ptr.hbm [resolvable:$true] %s334
          %337 = dma.vmem_to_hbm [thread:$0]  %s333, 256, %s335, %s317
        $region48: #{tpu_custom_call.1} parent=31 // pred_fallthru
          _
      $region32: #{tpu_custom_call.1} parent=5 // pred_fallthru
        _
      %p338 = scmp.le.s32.totalorder 2, %s16
      // Predicated region
      $region49: #{tpu_custom_call.1} parent=5 // pred_check
        %p339 = pneg %p338
      $region50: #{tpu_custom_call.1} parent=5 // pred_check_branch
        %341 = sbr.rel (%p339) target = $region52
      $region51: #{tpu_custom_call.1} parent=5 // pred_region
        %s342 = ssub.s32 %s16, 2
        // Predicated region
        $region53: #{tpu_custom_call.1} parent=51 // pred_check
          %p343 = pneg %p137
        $region54: #{tpu_custom_call.1} parent=51 // pred_check_branch
          %345 = sbr.rel (%p343) target = $region56
        $region55: #{tpu_custom_call.1} parent=51 // pred_region
          %s346 = sand.u32 %s122, 1
          %s347 = scalar_lea.sflag [#allocation4], %s346
          %s348 = sand.u32 %s122, 1
          %s349 = smul.addr %s348, 16
          %s350 = scalar_lea.vmem [#allocation8], %s349
          %352 = dma.done %s347, 256
        $region56: #{tpu_custom_call.1} parent=51 // pred_fallthru
          _
      $region52: #{tpu_custom_call.1} parent=5 // pred_fallthru
        _
    $region6: #{tpu_custom_call.1} parent=1 // loop_footer
      %s20 = sadd.s32 1, %s16
    $region7: #{tpu_custom_call.1} parent=1 // loop_footer_branch
      %15 = sbr.rel target = $region3
    $region8: #{tpu_custom_call.1} parent=1 // loop_exit
      _
    %353 = vsyncpa [#allocation3], 1
    %s354 = scalar_lea.sflag [#allocation3], 1
    %355 = vsyncpa %s354, 1
    %356 = vsyncpa [#allocation6], 1
    %357 = vsyncpa [#allocation4], 1
    %s358 = scalar_lea.sflag [#allocation4], 1
    %359 = vsyncpa %s358, 1

// kernel: tpu_custom_call.1
$region0: #{tpu_custom_call.1}
  #allocation0 [shape = 'u32[]', space=smem, size = 0x4, offset = 0x4, fixed_abs, tag = 'smem constant byte address 0x4 - core index']
  #allocation1 [shape = 'u32[72,128]{1,0:T(1,128)}', space=vmem, size = 0x9000, scoped, tag = 'internal scratch']
  %s0 = inlined_call_operand.hbm [shape: f32[16,32], index: 0, kind: input, shape index: {}]
  %s1 = inlined_call_operand.hbm [shape: bf16[32,256], index: 1, kind: input, shape index: {}]
  %s2 = inlined_call_operand.hbm [shape: f32[1,256], index: 2, kind: input, shape index: {}]
  %s3 = inlined_call_operand.hbm [shape: f32[16,256], index: 3, kind: output, shape index: {}]
  %s4 = sld [smem:[#allocation0]]
  $region57: #{tpu_custom_call.1} parent=0
    _
  %s6 = ssub.s32 1, %s4
  %s7 = scalar_select 0, %s6, %s4
  $region1: #{tpu_custom_call.1} parent=0
    #allocation2 [shape = 'u8[8192]{0}', space=vmem, size = 0x2000, scoped, tag = 'input window, operand 0']
    #allocation3 [shape = 's32[2]{0}', space=sflag, size = 0x8, scoped, tag = 'scoped memory for tpu_custom_call.1']
    #allocation4 [shape = 's32[2]{0}', space=sflag, size = 0x8, scoped, tag = 'scoped memory for tpu_custom_call.1']
    #allocation5 [shape = 'u8[16384]{0}', space=vmem, size = 0x4000, scoped, tag = 'input window, operand 1, single buffered']
    #allocation6 [shape = 's32[1]{0}', space=sflag, size = 0x4, scoped, tag = 'scoped memory for tpu_custom_call.1']
    #allocation7 [shape = 'u8[1024]{0}', space=vmem, size = 0x400, scoped, tag = 'input window, operand 2, single buffered']
    #allocation8 [shape = 'u8[16384]{0}', space=vmem, size = 0x4000, scoped, tag = 'output window, operand 0']
    %8 = vsyncpa [#allocation3], 0
    %s9 = scalar_lea.sflag [#allocation3], 1
    %10 = vsyncpa %s9, 0
    %11 = vsyncpa [#allocation6], 0
    %12 = vsyncpa [#allocation4], 0
    %s13 = scalar_lea.sflag [#allocation4], 1
    %14 = vsyncpa %s13, 0
    loop: start=0, step=1, limit=4
    $region2: #{tpu_custom_call.1} parent=1 // loop_pre_header
      _
    $region3: #{tpu_custom_call.1} parent=1 // loop_header
      %s16 = sphi 0, %s20
      %p17 = scmp.ge.s32.totalorder %s16, 4
      %s23 = sphi 0, %s35
      %s24 = sphi 0, %s31
      %s25 = sphi 0, %s23
      %s26 = sphi 0, %s24
      %s27 = sphi 0, %s25
      %s28 = sphi 0, %s26
      %s38 = sphi 0, %s40
      %s41 = sphi 0, %s38
      %s42 = sphi 0, %s41
      %s58 = sphi 0, %s42
      %s64 = sphi 0, %s66
      %s67 = sphi 0, %s64
      %s68 = sphi 0, %s67
      %s84 = sphi 0, %s68
      %s90 = sphi 0, %s92
      %s93 = sphi 0, %s90
      %s94 = sphi 0, %s93
      %s110 = sphi 0, %s94
      %s118 = sphi 0, %s120
      %s121 = sphi 0, %s118
      %s122 = sphi 0, %s121
      %s138 = sphi 0, %s122
    $region4: #{tpu_custom_call.1} parent=1 // loop_header_branch
      %19 = sbr.rel (%p17) target = $region8
    $region5: #{tpu_custom_call.1} parent=1 // loop_body
      %s21 = ssub.s32 %s16, 1
      %s22 = ssub.s32 %s16, 2
      %s29 = sadd.s32 1, %s24
      %p30 = scmp.ge.s32.totalorder %s29, 1
      %s31 = scalar_select %p30, 0, %s29
      %s32 = sadd.s32 1, %s23
      %s33 = scalar_select %p30, %s32, %s23
      %p34 = scmp.ge.s32.totalorder %s33, 2
      %s35 = scalar_select %p34, 0, %s33
      %s36 = ssub.s32 %s23, %s35
      %p37 = scmp.eq.s32.totalorder %s36, 0
      %s39 = sadd.s32 %s38, 1
      %s40 = scalar_select %p37, %s38, %s39
      %p43 = pneg %p37
      %p44 = scmp.eq.s32.totalorder %s16, 1
      %p45 = por %p43, %p44
      %p46 = scmp.ne.s32.totalorder %s38, %s41
      %p47 = scmp.eq.s32.totalorder %s16, 0
      %p48 = por %p46, %p47
      %p49 = scmp.ne.s32.totalorder %s38, %s41
      %p50 = scmp.eq.s32.totalorder %s21, 1
      %p51 = por %p49, %p50
      %p52 = scmp.ne.s32.totalorder %s41, %s42
      %p53 = scmp.eq.s32.totalorder %s21, 0
      %p54 = por %p52, %p53
      %p55 = scmp.ne.s32.totalorder %s41, %s42
      %p56 = scmp.eq.s32.totalorder %s22, 1
      %p57 = por %p55, %p56
      %p59 = scmp.ne.s32.totalorder %s42, %s58
      %p60 = scmp.eq.s32.totalorder %s22, 0
      %p61 = por %p59, %p60
      %s62 = ssub.s32 %s24, %s31
      %p63 = scmp.eq.s32.totalorder %s62, 0
      %s65 = sadd.s32 %s64, 1
      %s66 = scalar_select %p63, %s64, %s65
      %p69 = pneg %p63
      %p70 = scmp.eq.s32.totalorder %s16, 1
      %p71 = por %p69, %p70
      %p72 = scmp.ne.s32.totalorder %s64, %s67
      %p73 = scmp.eq.s32.totalorder %s16, 0
      %p74 = por %p72, %p73
      %p75 = scmp.ne.s32.totalorder %s64, %s67
      %p76 = scmp.eq.s32.totalorder %s21, 1
      %p77 = por %p75, %p76
      %p78 = scmp.ne.s32.totalorder %s67, %s68
      %p79 = scmp.eq.s32.totalorder %s21, 0
      %p80 = por %p78, %p79
      %p81 = scmp.ne.s32.totalorder %s67, %s68
      %p82 = scmp.eq.s32.totalorder %s22, 1
      %p83 = por %p81, %p82
      %p85 = scmp.ne.s32.totalorder %s68, %s84
      %p86 = scmp.eq.s32.totalorder %s22, 0
      %p87 = por %p85, %p86
      %s88 = ssub.s32 %s24, %s31
      %p89 = scmp.eq.s32.totalorder %s88, 0
      %s91 = sadd.s32 %s90, 1
      %s92 = scalar_select %p89, %s90, %s91
      %p95 = pneg %p89
      %p96 = scmp.eq.s32.totalorder %s16, 1
      %p97 = por %p95, %p96
      %p98 = scmp.ne.s32.totalorder %s90, %s93
      %p99 = scmp.eq.s32.totalorder %s16, 0
      %p100 = por %p98, %p99
      %p101 = scmp.ne.s32.totalorder %s90, %s93
      %p102 = scmp.eq.s32.totalorder %s21, 1
      %p103 = por %p101, %p102
      %p104 = scmp.ne.s32.totalorder %s93, %s94
      %p105 = scmp.eq.s32.totalorder %s21, 0
      %p106 = por %p104, %p105
      %p107 = scmp.ne.s32.totalorder %s93, %s94
      %p108 = scmp.eq.s32.totalorder %s22, 1
      %p109 = por %p107, %p108
      %p111 = scmp.ne.s32.totalorder %s94, %s110
      %p112 = scmp.eq.s32.totalorder %s22, 0
      %p113 = por %p111, %p112
      %s114 = ssub.s32 %s23, %s35
      %s115 = ssub.s32 %s24, %s31
      %s116 = sor.u32 %s114, %s115
      %p117 = scmp.eq.s32.totalorder %s116, 0
      %s119 = sadd.s32 %s118, 1
      %s120 = scalar_select %p117, %s118, %s119
      %p123 = pneg %p117
      %p124 = scmp.eq.s32.totalorder %s16, 1
      %p125 = por %p123, %p124
      %p126 = scmp.ne.s32.totalorder %s118, %s121
      %p127 = scmp.eq.s32.totalorder %s16, 0
      %p128 = por %p126, %p127
      %p129 = scmp.ne.s32.totalorder %s118, %s121
      %p130 = scmp.eq.s32.totalorder %s21, 1
      %p131 = por %p129, %p130
      %p132 = scmp.ne.s32.totalorder %s121, %s122
      %p133 = scmp.eq.s32.totalorder %s21, 0
      %p134 = por %p132, %p133
      %p135 = scmp.ne.s32.totalorder %s121, %s122
      %p136 = scmp.eq.s32.totalorder %s22, 1
      %p137 = por %p135, %p136
      %p139 = scmp.ne.s32.totalorder %s122, %s138
      %p140 = scmp.eq.s32.totalorder %s22, 0
      %p141 = por %p139, %p140
      %p142 = scmp.le.s32.totalorder 1, %s16
      %p143 = scmp.lt.s32.totalorder %s16, 3
      %p144 = pnand %p142, %p143
      %p145 = pneg %p144
      // Predicated region
      $region9: #{tpu_custom_call.1} parent=5 // pred_check
        _
      $region10: #{tpu_custom_call.1} parent=5 // pred_check_branch
        %147 = sbr.rel (%p144) target = $region12
      $region11: #{tpu_custom_call.1} parent=5 // pred_region
        %s148 = ssub.s32 %s16, 1
        // Predicated region
        $region13: #{tpu_custom_call.1} parent=11 // pred_check
          %p149 = pneg %p80
        $region14: #{tpu_custom_call.1} parent=11 // pred_check_branch
          %151 = sbr.rel (%p149) target = $region16
        $region15: #{tpu_custom_call.1} parent=11 // pred_region
          %s152 = smul.u32 2, %s26
          %154 = vsyncadd [#allocation6], 0
          %s155 = smul.addr %s152, 4
          %s156 = scalar_lea.hbm %s1, %s155
          %s157 = sshll.u32 %s156, 4
          %s158 = int_to_ptr.hbm [resolvable:$true] %s157
          %s159 = sshll.u32 [#allocation5], 4
          %s160 = int_to_ptr.vmem [resolvable:$true] %s159
          %165 = dma.hbm_to_vmem [thread:$0]  %s158, 512, %s160, [#allocation6], 128, 128, 8
        $region16: #{tpu_custom_call.1} parent=11 // pred_fallthru
          _
        // Predicated region
        $region17: #{tpu_custom_call.1} parent=11 // pred_check
          %p166 = pneg %p106
        $region18: #{tpu_custom_call.1} parent=11 // pred_check_branch
          %168 = sbr.rel (%p166) target = $region20
        $region19: #{tpu_custom_call.1} parent=11 // pred_region
          %s169 = smul.u32 2, %s26
          %171 = vsyncadd [#allocation6], 0
          %s172 = scalar_lea.hbm %s2, %s169
          %s174 = sshll.u32 %s172, 4
          %s175 = int_to_ptr.hbm [resolvable:$true] %s174
          %s176 = sshll.u32 [#allocation7], 4
          %s177 = int_to_ptr.vmem [resolvable:$true] %s176
          %179 = dma.hbm_to_vmem [thread:$0]  %s175, 32, %s177, [#allocation6]
        $region20: #{tpu_custom_call.1} parent=11 // pred_fallthru
          _
      $region12: #{tpu_custom_call.1} parent=5 // pred_fallthru
        _
      %p180 = scmp.lt.s32.totalorder %s16, 2
      // Predicated region
      $region21: #{tpu_custom_call.1} parent=5 // pred_check
        %p181 = pneg %p180
      $region22: #{tpu_custom_call.1} parent=5 // pred_check_branch
        %183 = sbr.rel (%p181) target = $region24
      $region23: #{tpu_custom_call.1} parent=5 // pred_region
        // Predicated region
        $region25: #{tpu_custom_call.1} parent=23 // pred_check
          %p184 = pneg %p48
        $region26: #{tpu_custom_call.1} parent=23 // pred_check_branch
          %186 = sbr.rel (%p184) target = $region28
        $region27: #{tpu_custom_call.1} parent=23 // pred_region
          %s187 = sand.u32 %s38, 1
          %s188 = scalar_lea.sflag [#allocation3], %s187
          %s189 = sand.u32 %s38, 1
          %s190 = smul.addr %s189, 8
          %s191 = scalar_lea.vmem [#allocation2], %s190
          %193 = vsyncadd %s188, 0
          %s194 = smul.addr %s23, 8
          %s195 = scalar_lea.hbm %s0, %s194
          %s197 = sshll.u32 %s195, 4
          %s198 = int_to_ptr.hbm [resolvable:$true] %s197
          %s199 = sshll.u32 %s191, 4
          %s200 = int_to_ptr.vmem [resolvable:$true] %s199
          %202 = dma.hbm_to_vmem [thread:$0]  %s198, 128, %s200, %s188
        $region28: #{tpu_custom_call.1} parent=23 // pred_fallthru
          _
      $region24: #{tpu_custom_call.1} parent=5 // pred_fallthru
        _
      %p203 = scmp.le.s32.totalorder 1, %s16
      %p204 = scmp.lt.s32.totalorder %s16, 3
      %p205 = pnand %p203, %p204
      %p206 = pneg %p205
      // Predicated region
      $region29: #{tpu_custom_call.1} parent=5 // pred_check
        _
      $region30: #{tpu_custom_call.1} parent=5 // pred_check_branch
        %208 = sbr.rel (%p205) target = $region32
      $region31: #{tpu_custom_call.1} parent=5 // pred_region
        %s209 = ssub.s32 %s16, 1
        %s210 = sand.u32 %s41, 1
        %s211 = scalar_lea.sflag [#allocation3], %s210
        %s212 = sand.u32 %s41, 1
        %s213 = smul.addr %s212, 8
        %s214 = scalar_lea.vmem [#allocation2], %s213
        // Predicated region
        $region33: #{tpu_custom_call.1} parent=31 // pred_check
          %p215 = pneg %p54
        $region34: #{tpu_custom_call.1} parent=31 // pred_check_branch
          %217 = sbr.rel (%p215) target = $region36
        $region35: #{tpu_custom_call.1} parent=31 // pred_region
          %219 = dma.done %s211, 128
        $region36: #{tpu_custom_call.1} parent=31 // pred_fallthru
          _
        // Predicated region
        $region37: #{tpu_custom_call.1} parent=31 // pred_check
          %p220 = pneg %p80
        $region38: #{tpu_custom_call.1} parent=31 // pred_check_branch
          %222 = sbr.rel (%p220) target = $region40
        $region39: #{tpu_custom_call.1} parent=31 // pred_region
          %224 = dma.done [#allocation6], 512
        $region40: #{tpu_custom_call.1} parent=31 // pred_fallthru
          _
        // Predicated region
        $region41: #{tpu_custom_call.1} parent=31 // pred_check
          %p225 = pneg %p106
        $region42: #{tpu_custom_call.1} parent=31 // pred_check_branch
          %227 = sbr.rel (%p225) target = $region44
        $region43: #{tpu_custom_call.1} parent=31 // pred_region
          %229 = dma.done [#allocation6], 32
        $region44: #{tpu_custom_call.1} parent=31 // pred_fallthru
          _
        %s230 = sand.u32 %s41, 1
        %s231 = scalar_lea.sflag [#allocation3], %s230
        %s232 = sand.u32 %s41, 1
        %s233 = smul.addr %s232, 8
        %s234 = scalar_lea.vmem [#allocation2], %s233
        %p235 = pneg %p54
        %p236 = pneg %p51
        %p237 = pneg %p80
        %p238 = pneg %p77
        %p239 = pneg %p106
        %p240 = pneg %p103
        %p241 = pneg %p134
        %p242 = pneg %p131
        %s243 = sand.u32 %s121, 1
        %s244 = scalar_lea.sflag [#allocation4], %s243
        %s245 = sand.u32 %s121, 1
        %s246 = smul.addr %s245, 16
        %s247 = scalar_lea.vmem [#allocation8], %s246
        %s248 = smul.u32 2, %s26
        %s249 = smul.u32 2, %s26
        %s250 = smul.u32 2, %s26
        %v252 = vld [vmem:[%s214] sm:$0xff]
        %v253 = vpack.c.bf16 %v252, %v252
        %v254 = vld [vmem:[#allocation5] sm:$0xff]
        %v255 = vld [vmem:[#allocation5 + $0x8] sm:$0xff]
        %v256 = vld [vmem:[#allocation5 + $0x10] sm:$0xff]
        %v257 = vld [vmem:[#allocation5 + $0x18] sm:$0xff]
        %v258 = vld [vmem:[#allocation7] sm:$0x3]
        %v260 = vperm.slane %v258, 0
        %v261 = vperm.slane %v258, 1
        %v268 = vunpack.c.l.b16 %v254
        %v269 = vunpack.c.h.b16 %v254
        %v270 = vunpack.c.l.b16 %v255
        %v271 = vunpack.c.h.b16 %v255
        %v272 = vunpack.c.l.b16 %v256
        %v273 = vunpack.c.h.b16 %v256
        %v274 = vunpack.c.l.b16 %v257
        %v275 = vunpack.c.h.b16 %v257
        %v276 = vpack.c.b16 %v270, %v268
        %v277 = vpack.c.b16 %v271, %v269
        %v278 = vpack.c.b16 %v274, %v272
        %v279 = vpack.c.b16 %v275, %v273
        %vm284 = vcmask 261120
        %v286 = vsel %vm284, %v253, 0
        %288 = vmatpush.bf16.msra.mxu0 0
        %289 = vmatpush.bf16.msra.mxu0 0
        %290 = vmatpush.bf16.msra.mxu0 0
        %291 = vmatpush.bf16.msra.mxu0 0
        %292 = vmatpush.bf16.msra.mxu0 0
        %293 = vmatpush.bf16.msra.mxu0 0
        %294 = vmatpush.bf16.msra.mxu0 %v278
        %295 = vmatpush.bf16.msra.mxu0 %v276
        %296 = vmatmul.bf16.gmra.mxu0 %v286
        %v297 = vpop.f32.mrf.mxu0
        %v298 = vadd.f32 %v260, %v297
        %v299 = vpop.f32.mrf.mxu0
        %300 = vdwg.mxu0
        %301 = vmatpush.bf16.msra.mxu0 0
        %302 = vmatpush.bf16.msra.mxu0 0
        %303 = vmatpush.bf16.msra.mxu0 0
        %304 = vmatpush.bf16.msra.mxu0 0
        %305 = vmatpush.bf16.msra.mxu0 0
        %306 = vmatpush.bf16.msra.mxu0 0
        %307 = vmatpush.bf16.msra.mxu0 %v279
        %308 = vmatpush.bf16.msra.mxu0 %v277
        %309 = vmatmul.bf16.gmra.mxu0 %v286
        %v310 = vpop.f32.mrf.mxu0
        %v311 = vadd.f32 %v261, %v310
        %v312 = vpop.f32.mrf.mxu0
        %313 = vdwg.mxu0
        %314 = vst [vmem:[%s247] sm:$0xff] %v298
        %315 = vst [vmem:[%s247 + $0x8] sm:$0xff] %v311
        %s316 = sand.u32 %s121, 1
        %s317 = scalar_lea.sflag [#allocation4], %s316
        %s318 = sand.u32 %s121, 1
        %s319 = smul.addr %s318, 16
        %s320 = scalar_lea.vmem [#allocation8], %s319
        // Predicated region
        $region45: #{tpu_custom_call.1} parent=31 // pred_check
          %p321 = pneg %p131
        $region46: #{tpu_custom_call.1} parent=31 // pred_check_branch
          %323 = sbr.rel (%p321) target = $region48
        $region47: #{tpu_custom_call.1} parent=31 // pred_region
          %s324 = smul.u32 2, %s26
          %326 = vsyncadd %s317, 0
          %s327 = smul.addr %s25, 2
          %s328 = sadd.s32 %s324, %s327
          %s329 = smul.addr %s328, 8
          %s330 = scalar_lea.hbm %s3, %s329
          %s332 = sshll.u32 %s320, 4
          %s333 = int_to_ptr.vmem [resolvable:$true] %s332
          %s334 = sshll.u32 %s330, 4
          %s335 = int_to_ptr.hbm [resolvable:$true] %s334
          %337 = dma.vmem_to_hbm [thread:$0]  %s333, 256, %s335, %s317
        $region48: #{tpu_custom_call.1} parent=31 // pred_fallthru
          _
      $region32: #{tpu_custom_call.1} parent=5 // pred_fallthru
        _
      %p338 = scmp.le.s32.totalorder 2, %s16
      // Predicated region
      $region49: #{tpu_custom_call.1} parent=5 // pred_check
        %p339 = pneg %p338
      $region50: #{tpu_custom_call.1} parent=5 // pred_check_branch
        %341 = sbr.rel (%p339) target = $region52
      $region51: #{tpu_custom_call.1} parent=5 // pred_region
        %s342 = ssub.s32 %s16, 2
        // Predicated region
        $region53: #{tpu_custom_call.1} parent=51 // pred_check
          %p343 = pneg %p137
        $region54: #{tpu_custom_call.1} parent=51 // pred_check_branch
          %345 = sbr.rel (%p343) target = $region56
        $region55: #{tpu_custom_call.1} parent=51 // pred_region
          %s346 = sand.u32 %s122, 1
          %s347 = scalar_lea.sflag [#allocation4], %s346
          %s348 = sand.u32 %s122, 1
          %s349 = smul.addr %s348, 16
          %s350 = scalar_lea.vmem [#allocation8], %s349
          %352 = dma.done %s347, 256
        $region56: #{tpu_custom_call.1} parent=51 // pred_fallthru
          _
      $region52: #{tpu_custom_call.1} parent=5 // pred_fallthru
        _
    $region6: #{tpu_custom_call.1} parent=1 // loop_footer
      %s20 = sadd.s32 1, %s16
    $region7: #{tpu_custom_call.1} parent=1 // loop_footer_branch
      %15 = sbr.rel target = $region3
    $region8: #{tpu_custom_call.1} parent=1 // loop_exit
      _
    %353 = vsyncpa [#allocation3], 1
    %s354 = scalar_lea.sflag [#allocation3], 1
    %355 = vsyncpa %s354, 1
    %356 = vsyncpa [#allocation6], 1
    %357 = vsyncpa [#allocation4], 1
    %s358 = scalar_lea.sflag [#allocation4], 1
    %359 = vsyncpa %s358, 1

</llo_original>
